<compile_context>
chip_gen: v7x
topology: tpu7x:2x2x1
jax: 0.10.0
libtpu: 0.0.40
codegen_flags: <defaults>
</compile_context>

<pallas_src>
import functools
import math

import jax
import jax.numpy as jnp
import numpy as np
from jax.experimental import pallas as pl
from jax.experimental.pallas import tpu as pltpu


def _c1d_kernel(xm_ref, xh_ref, w_ref, gamma_ref, beta_ref, o_ref, *,
                n, tl, k, d, f, neg_slope, eps):
    """One L-tile: conv-as-matmul + BatchNorm1d (batch stats) + LeakyReLU."""
    # ---- in-VMEM windowing (replaces the old HBM im2col gather) -------------
    main = xm_ref[...]                                    # (N, TL, D) bf16
    if k > 1:
        halo = xh_ref[...].reshape(n, k - 1, d)           # (N, K-1, D) bf16
        slab = jnp.concatenate([main, halo], axis=1)      # (N, TL+K-1, D)
    else:
        slab = main
    # a[n, l, k*D + d] = slab[n, l + k, d]   (padded-frame window of output l)
    a = jnp.concatenate([slab[:, t:t + tl, :] for t in range(k)], axis=-1)
    a = a.reshape(n * tl, k * d)                          # (N*TL, K*D) bf16

    # ---- Conv1d: ONE MXU matmul, f32 accumulation ----------------------------
    y = jnp.dot(a, w_ref[...], preferred_element_type=jnp.float32)   # (N*TL, F)
    y3 = y.reshape(n, tl, f)                              # rows ordered (n, l)

    # ---- BatchNorm1d: training-mode stats per frame l over (batch, filters) -
    inv_cnt = 1.0 / float(n * f)
    mean = jnp.sum(y3, axis=(0, 2), keepdims=True) * inv_cnt          # (1,TL,1)
    ex2 = jnp.sum(y3 * y3, axis=(0, 2), keepdims=True) * inv_cnt
    var = jnp.maximum(ex2 - mean * mean, 0.0)             # guard tiny negatives
    scale = gamma_ref[...].reshape(1, tl, 1) * jax.lax.rsqrt(var + eps)
    shift = beta_ref[...].reshape(1, tl, 1) - mean * scale
    out = y3 * scale + shift

    # ---- LeakyReLU(0.2): single VPU max (no select/mask) ---------------------
    out = jnp.maximum(out, neg_slope * out)
    o_ref[...] = out.astype(o_ref.dtype)                  # (N, TL, F), 1x bytes


def _pick_tile_l(L, K):
    """Largest multiple-of-8 frame tile that divides L (cap 512), else L."""
    lo = max(K - 1, 1)
    for cand in (512, 256, 128, 64, 32, 16, 8):
        if cand <= L and L % cand == 0 and cand >= lo:
            return cand
    return L


@functools.partial(jax.jit, static_argnames=("kernel", "tile_l"))
def c1d_forward(x, conv_w, bn_gamma, bn_beta, *, kernel, tile_l=None):
    """x: (N, L, D) f32; conv_w: (F, D, K) (PyTorch Conv1d layout) -> (N, L, F)."""
    N, L, D = x.shape
    F_, D_, K = conv_w.shape
    assert D_ == D and K == kernel
    pad = math.ceil((kernel - 1) / 2)

    TL = tile_l if tile_l is not None else _pick_tile_l(L, K)
    assert L % TL == 0, "frame tile must divide L"
    assert TL >= max(K - 1, 1) and TL >= pad
    num_tiles = L // TL
    H = max(K - 1, 1)                  # halo frames per tile (dummy 1 when K==1)

    # ---- wrapper layout plumbing (no gather, no K x duplication) -------------
    xq = x.astype(jnp.bfloat16)        # bf16 MXU inputs; accumulation stays f32
    # Padded frame t corresponds to original frame t - pad; zeros outside [0, L)
    # reproduce Conv1d zero padding (and the even-K "cut last element").
    x_p = jnp.pad(xq, ((0, 0), (pad, TL - pad), (0, 0)))       # (N, L + TL, D)
    x_main = x_p[:, :L, :]                       # tile i: padded frames [i*TL, i*TL+TL)
    # Halo: first K-1 padded frames after each tile, via static slice + reshape.
    x_halo = x_p[:, TL:TL + L, :].reshape(N, num_tiles, TL, D)[:, :, :H, :]

    # Conv taps as a (K*D, F) matrix: row k*D + d  <-  conv_w[f, d, k].
    w = jnp.transpose(conv_w, (2, 1, 0)).reshape(K * D, F_).astype(jnp.bfloat16)
    gamma = bn_gamma.reshape(L, 1).astype(jnp.float32)
    beta = bn_beta.reshape(L, 1).astype(jnp.float32)

    kernel_fn = functools.partial(_c1d_kernel, n=N, tl=TL, k=K, d=D, f=F_,
                                  neg_slope=0.2, eps=1e-5)

    cost = pl.CostEstimate(
        flops=2 * N * L * K * D * F_,
        transcendentals=L,                                   # one rsqrt per frame
        bytes_accessed=(x_main.size + x_halo.size + w.size) * 2
        + (gamma.size + beta.size) * 4 + N * L * F_ * 4,
    )

    out = pl.pallas_call(
        kernel_fn,
        out_shape=jax.ShapeDtypeStruct((N, L, F_), jnp.float32),
        grid=(num_tiles,),
        in_specs=[
            pl.BlockSpec((N, TL, D), lambda i: (0, i, 0)),       # frame tile
            pl.BlockSpec((N, 1, H, D), lambda i: (0, i, 0, 0)),  # (K-1)-frame halo
            pl.BlockSpec((K * D, F_), lambda i: (0, 0)),         # conv taps
            pl.BlockSpec((TL, 1), lambda i: (i, 0)),             # BN gamma
            pl.BlockSpec((TL, 1), lambda i: (i, 0)),             # BN beta
        ],
        out_specs=pl.BlockSpec((N, TL, F_), lambda i: (0, i, 0)),
        compiler_params=pltpu.CompilerParams(
            # Per-frame BN stats => L-tiles fully independent: safe to shard the
            # grid across both TensorCores on v7x.
            dimension_semantics=("parallel",),
            # v7x-safe cap; with the large L-tiles _pick_tile_l chooses at
            # production L, raise toward 64-96 MiB on v5e/v6e (128 MiB VMEM).
            vmem_limit_bytes=32 * 1024 * 1024,
        ),
        cost_estimate=cost,
    )(x_main, x_halo, w, gamma, beta)
    return out


def c1d_reference(x, conv_w, bn_gamma, bn_beta, *, kernel):
    """Pure-JAX mirror of the PyTorch module (training-mode BN).  Inputs are
    quantized to bf16 exactly like the kernel's MXU inputs so the comparison
    isolates kernel correctness (accumulation is f32 in both paths)."""
    pad = math.ceil((kernel - 1) / 2)
    xq = x.astype(jnp.bfloat16).astype(jnp.float32)
    wq = conv_w.astype(jnp.bfloat16).astype(jnp.float32)
    xc = jnp.transpose(xq, (0, 2, 1))                                  # (N, D, L)
    y = jax.lax.conv_general_dilated(
        xc, wq, window_strides=(1,), padding=[(pad, pad)],
        dimension_numbers=("NCH", "OIH", "NCH"))
    if kernel % 2 == 0:
        y = y[:, :, :-1]
    y = jnp.transpose(y, (0, 2, 1))                                    # (N, L, F)
    mean = jnp.mean(y, axis=(0, 2), keepdims=True)
    var = jnp.var(y, axis=(0, 2), keepdims=True)
    y = (y - mean) / jnp.sqrt(var + 1e-5) * bn_gamma[None, :, None] + bn_beta[None, :, None]
    return jnp.where(y >= 0, y, 0.2 * y)


if __name__ == "__main__":
    # Small shapes consistent with the module's forward:
    # batch=2, input_channels (frames L)=16, input_dims D=8, filters=16, kernel=3.
    N, input_channels, input_dims, filters, kernel_size = 2, 16, 8, 16, 3

    key = jax.random.PRNGKey(0)
    kx, kw = jax.random.split(key)
    x = jax.random.normal(kx, (N, input_channels, input_dims), jnp.float32)

    # Conv1d weight (filters, input_dims, kernel), bias=False; PyTorch-style
    # uniform(-1/sqrt(fan_in), 1/sqrt(fan_in)) init.
    bound = 1.0 / math.sqrt(input_dims * kernel_size)
    conv_w = jax.random.uniform(kw, (filters, input_dims, kernel_size),
                                jnp.float32, -bound, bound)
    # BatchNorm1d defaults: gamma=1, beta=0.
    bn_gamma = jnp.ones((input_channels,), jnp.float32)
    bn_beta = jnp.zeros((input_channels,), jnp.float32)

    # tile_l=8 exercises a 2-step frame grid (halo blocks + pipelining) even at
    # the toy shape; the auto-pick would otherwise use a single full-L tile.
    out = c1d_forward(x, conv_w, bn_gamma, bn_beta, kernel=kernel_size, tile_l=8)
    out = jax.block_until_ready(out)

    ref = c1d_reference(x, conv_w, bn_gamma, bn_beta, kernel=kernel_size)
    assert out.shape == (N, input_channels, filters)
    assert np.allclose(np.asarray(out), np.asarray(ref), atol=1e-3, rtol=1e-3), \
        "Pallas kernel mismatch vs JAX reference"
    print("KERNEL_OK")
</pallas_src>

<mosaic_0001>
module attributes {stable_mosaic.version = 11 : i64} {
  func.func @_c1d_kernel(%arg0: i32, %arg1: memref<2x8x8xbf16, #tpu.memory_space<vmem>>, %arg2: memref<2x1x2x8xbf16, #tpu.memory_space<vmem>>, %arg3: memref<24x16xbf16, #tpu.memory_space<vmem>>, %arg4: memref<8x1xf32, #tpu.memory_space<vmem>>, %arg5: memref<8x1xf32, #tpu.memory_space<vmem>>, %arg6: memref<2x8x16xf32, #tpu.memory_space<vmem>>) attributes {dimension_semantics = [#tpu.dimension_semantics<parallel>], iteration_bounds = array<i64: 2>, scalar_prefetch = 0 : i64, scratch_operands = 0 : i64, tpu.core_type = #tpu.core_type<tc>, window_params = [{transform_indices = @transform_0, window_bounds = array<i64: 2, 8, 8>}, {transform_indices = @transform_1, window_bounds = array<i64: 2, 1, 2, 8>}, {pipeline_mode = #tpu.pipeline_mode<synchronous>, transform_indices = @transform_2, window_bounds = array<i64: 24, 16>}, {transform_indices = @transform_3, window_bounds = array<i64: 8, 1>}, {transform_indices = @transform_4, window_bounds = array<i64: 8, 1>}, {transform_indices = @transform_5, window_bounds = array<i64: 2, 8, 16>}]} {
    %c0 = arith.constant 0 : index
    %c0_0 = arith.constant 0 : index
    %c0_1 = arith.constant 0 : index
    %0 = vector.load %arg1[%c0, %c0_0, %c0_1] : memref<2x8x8xbf16, #tpu.memory_space<vmem>>, vector<2x8x8xbf16>
    %c0_2 = arith.constant 0 : index
    %c0_3 = arith.constant 0 : index
    %c0_4 = arith.constant 0 : index
    %c0_5 = arith.constant 0 : index
    %1 = vector.load %arg2[%c0_2, %c0_3, %c0_4, %c0_5] : memref<2x1x2x8xbf16, #tpu.memory_space<vmem>>, vector<2x1x2x8xbf16>
    %2 = vector.shape_cast %1 : vector<2x1x2x8xbf16> to vector<2x2x8xbf16>
    %3 = tpu.concatenate %0, %2 in 1 : vector<2x8x8xbf16>, vector<2x2x8xbf16> -> vector<2x10x8xbf16>
    %4 = vector.extract_strided_slice %3 {offsets = [0, 0, 0], sizes = [2, 8, 8], strides = [1, 1, 1]} : vector<2x10x8xbf16> to vector<2x8x8xbf16>
    %5 = vector.extract_strided_slice %3 {offsets = [0, 1, 0], sizes = [2, 8, 8], strides = [1, 1, 1]} : vector<2x10x8xbf16> to vector<2x8x8xbf16>
    %6 = vector.extract_strided_slice %3 {offsets = [0, 2, 0], sizes = [2, 8, 8], strides = [1, 1, 1]} : vector<2x10x8xbf16> to vector<2x8x8xbf16>
    %7 = tpu.concatenate %4, %5, %6 in 2 : vector<2x8x8xbf16>, vector<2x8x8xbf16>, vector<2x8x8xbf16> -> vector<2x8x24xbf16>
    %8 = vector.shape_cast %7 : vector<2x8x24xbf16> to vector<16x24xbf16>
    %c0_6 = arith.constant 0 : index
    %c0_7 = arith.constant 0 : index
    %9 = vector.load %arg3[%c0_6, %c0_7] : memref<24x16xbf16, #tpu.memory_space<vmem>>, vector<24x16xbf16>
    %cst = arith.constant dense<0.000000e+00> : vector<16x16xf32>
    %10 = tpu.matmul %8, %9, %cst {dimension_numbers = #tpu.dot_dimension_numbers<[1], [0], [0], [1], [0, 0, 1, 1], [], []>} : vector<16x24xbf16>, vector<24x16xbf16>, vector<16x16xf32> -> vector<16x16xf32>
    %11 = vector.shape_cast %10 : vector<16x16xf32> to vector<2x8x16xf32>
    %cst_8 = arith.constant dense<0.000000e+00> : vector<8xf32>
    %12 = vector.multi_reduction <add>, %11, %cst_8 [0, 2] : vector<2x8x16xf32> to vector<8xf32>
    %13 = vector.shape_cast %12 : vector<8xf32> to vector<1x8x1xf32>
    %cst_9 = arith.constant 3.125000e-02 : f32
    %14 = vector.broadcast %cst_9 : f32 to vector<1x8x1xf32>
    %15 = arith.mulf %13, %14 : vector<1x8x1xf32>
    %16 = arith.mulf %11, %11 : vector<2x8x16xf32>
    %cst_10 = arith.constant dense<0.000000e+00> : vector<8xf32>
    %17 = vector.multi_reduction <add>, %16, %cst_10 [0, 2] : vector<2x8x16xf32> to vector<8xf32>
    %18 = vector.shape_cast %17 : vector<8xf32> to vector<1x8x1xf32>
    %cst_11 = arith.constant 3.125000e-02 : f32
    %19 = vector.broadcast %cst_11 : f32 to vector<1x8x1xf32>
    %20 = arith.mulf %18, %19 : vector<1x8x1xf32>
    %21 = arith.mulf %15, %15 : vector<1x8x1xf32>
    %22 = arith.subf %20, %21 : vector<1x8x1xf32>
    %cst_12 = arith.constant 0.000000e+00 : f32
    %23 = vector.broadcast %cst_12 : f32 to vector<1x8x1xf32>
    %24 = arith.maximumf %22, %23 : vector<1x8x1xf32>
    %c0_13 = arith.constant 0 : index
    %c0_14 = arith.constant 0 : index
    %25 = vector.load %arg4[%c0_13, %c0_14] : memref<8x1xf32, #tpu.memory_space<vmem>>, vector<8x1xf32>
    %26 = vector.shape_cast %25 : vector<8x1xf32> to vector<1x8x1xf32>
    %cst_15 = arith.constant 9.99999974E-6 : f32
    %27 = vector.broadcast %cst_15 : f32 to vector<1x8x1xf32>
    %28 = arith.addf %24, %27 : vector<1x8x1xf32>
    %29 = math.rsqrt %28 : vector<1x8x1xf32>
    %30 = arith.mulf %26, %29 : vector<1x8x1xf32>
    %c0_16 = arith.constant 0 : index
    %c0_17 = arith.constant 0 : index
    %31 = vector.load %arg5[%c0_16, %c0_17] : memref<8x1xf32, #tpu.memory_space<vmem>>, vector<8x1xf32>
    %32 = vector.shape_cast %31 : vector<8x1xf32> to vector<1x8x1xf32>
    %33 = arith.mulf %15, %30 : vector<1x8x1xf32>
    %34 = arith.subf %32, %33 : vector<1x8x1xf32>
    %35 = vector.broadcast %30 : vector<1x8x1xf32> to vector<2x8x16xf32>
    %36 = arith.mulf %11, %35 : vector<2x8x16xf32>
    %37 = vector.broadcast %34 : vector<1x8x1xf32> to vector<2x8x16xf32>
    %38 = arith.addf %36, %37 : vector<2x8x16xf32>
    %cst_18 = arith.constant 2.000000e-01 : f32
    %39 = vector.broadcast %cst_18 : f32 to vector<2x8x16xf32>
    %40 = arith.mulf %39, %38 : vector<2x8x16xf32>
    %41 = arith.maximumf %38, %40 : vector<2x8x16xf32>
    %c0_19 = arith.constant 0 : index
    %c0_20 = arith.constant 0 : index
    %c0_21 = arith.constant 0 : index
    %42 = vector.load %arg6[%c0_19, %c0_20, %c0_21] : memref<2x8x16xf32, #tpu.memory_space<vmem>>, vector<2x8x16xf32>
    tpu.vector_store %arg6[%c0_19, %c0_20, %c0_21], %41 {strides = array<i32>} : memref<2x8x16xf32, #tpu.memory_space<vmem>>, vector<2x8x16xf32>,
    return
  }
  func.func @transform_0(%arg0: i32) -> (i32, i32, i32) {
    %c0_i32 = arith.constant 0 : i32
    %c0_i32_0 = arith.constant 0 : i32
    %c0_i32_1 = arith.constant 0 : i32
    return %c0_i32, %arg0, %c0_i32_0 : i32, i32, i32
  }
  func.func @transform_1(%arg0: i32) -> (i32, i32, i32, i32) {
    %c0_i32 = arith.constant 0 : i32
    %c0_i32_0 = arith.constant 0 : i32
    %c0_i32_1 = arith.constant 0 : i32
    %c0_i32_2 = arith.constant 0 : i32
    return %c0_i32, %arg0, %c0_i32_0, %c0_i32_1 : i32, i32, i32, i32
  }
  func.func @transform_2(%arg0: i32) -> (i32, i32) {
    %c0_i32 = arith.constant 0 : i32
    %c0_i32_0 = arith.constant 0 : i32
    %c0_i32_1 = arith.constant 0 : i32
    return %c0_i32, %c0_i32_0 : i32, i32
  }
  func.func @transform_3(%arg0: i32) -> (i32, i32) {
    %c0_i32 = arith.constant 0 : i32
    %c0_i32_0 = arith.constant 0 : i32
    return %arg0, %c0_i32 : i32, i32
  }
  func.func @transform_4(%arg0: i32) -> (i32, i32) {
    %c0_i32 = arith.constant 0 : i32
    %c0_i32_0 = arith.constant 0 : i32
    return %arg0, %c0_i32 : i32, i32
  }
  func.func @transform_5(%arg0: i32) -> (i32, i32, i32) {
    %c0_i32 = arith.constant 0 : i32
    %c0_i32_0 = arith.constant 0 : i32
    %c0_i32_1 = arith.constant 0 : i32
    return %c0_i32, %arg0, %c0_i32_0 : i32, i32, i32
  }
}

</mosaic_0001>

<llo_original>
// kernel: c1d_forward.1
$region0: #{c1d_forward.1}
  #allocation0 [shape = 'u32[]', space=smem, size = 0x4, offset = 0x4, fixed_abs, tag = 'smem constant byte address 0x4 - core index']
  #allocation1 [shape = 'u32[144,128]{1,0:T(1,128)}', space=vmem, size = 0x12000, scoped, tag = 'internal scratch']
  %s0 = inlined_call_operand.vmem [shape: bf16[2,16,8], index: 0, kind: input, shape index: {}]
  %s1 = inlined_call_operand.vmem [shape: bf16[2,2,2,8], index: 1, kind: input, shape index: {}]
  %s2 = inlined_call_operand.vmem [shape: bf16[24,16], index: 2, kind: input, shape index: {}]
  %s3 = inlined_call_operand.vmem [shape: f32[16,1], index: 3, kind: input, shape index: {}]
  %s4 = inlined_call_operand.vmem [shape: f32[16,1], index: 4, kind: input, shape index: {}]
  %s5 = inlined_call_operand.hbm [shape: f32[2,16,16], index: 5, kind: output, shape index: {}]
  %s6 = sld [smem:[#allocation0]]
  $region128: #{c1d_forward.1} parent=0
    _
  %s8 = ssub.s32 1, %s6
  %s9 = scalar_select 0, %s8, %s6
  $region1: #{c1d_forward.1} parent=0
    #allocation2 [shape = 'u8[8192]{0}', space=vmem, size = 0x2000, scoped, tag = 'input window, operand 0']
    #allocation3 [shape = 'u8[2048]{0}', space=vmem, size = 0x800, scoped, tag = 'input window, operand 1']
    #allocation4 [shape = 'u8[16384]{0}', space=vmem, size = 0x4000, scoped, tag = 'output window, operand 0']
    #allocation5 [shape = 's32[2]{0}', space=sflag, size = 0x8, scoped, tag = 'scoped memory for c1d_forward.1']
    %10 = vsyncpa [#allocation5], 0
    %s11 = scalar_lea.sflag [#allocation5], 1
    %12 = vsyncpa %s11, 0
    loop: start=0, step=1, limit=4
    $region2: #{c1d_forward.1} parent=1 // loop_pre_header
      _
    $region3: #{c1d_forward.1} parent=1 // loop_header
      %s14 = sphi 0, %s18
      %p15 = scmp.ge.s32.totalorder %s14, 4
      %s24 = sphi 0, %s26
      %s27 = sphi 0, %s24
      %s28 = sphi 0, %s27
      %s44 = sphi 0, %s28
      %s50 = sphi 0, %s52
      %s53 = sphi 0, %s50
      %s54 = sphi 0, %s53
      %s70 = sphi 0, %s54
      %s74 = sphi 0, %s74
      %s76 = sphi 0, %s74
      %s77 = sphi 0, %s76
      %s91 = sphi 0, %s77
      %s97 = sphi 0, %s99
      %s100 = sphi 0, %s97
      %s101 = sphi 0, %s100
      %s117 = sphi 0, %s101
      %s123 = sphi 0, %s125
      %s126 = sphi 0, %s123
      %s127 = sphi 0, %s126
      %s143 = sphi 0, %s127
      %s149 = sphi 0, %s151
      %s152 = sphi 0, %s149
      %s153 = sphi 0, %s152
      %s169 = sphi 0, %s153
    $region4: #{c1d_forward.1} parent=1 // loop_header_branch
      %17 = sbr.rel (%p15) target = $region8
    $region5: #{c1d_forward.1} parent=1 // loop_body
      %s19 = ssub.s32 %s14, 1
      %s20 = ssub.s32 %s14, 2
      %s21 = sadd.s32 %s14, 1
      %s22 = ssub.s32 %s14, %s21
      %p23 = scmp.eq.s32.totalorder %s22, 0
      %s25 = sadd.s32 %s24, 1
      %s26 = scalar_select %p23, %s24, %s25
      %p29 = pneg %p23
      %p30 = scmp.eq.s32.totalorder %s14, 1
      %p31 = por %p29, %p30
      %p32 = scmp.ne.s32.totalorder %s24, %s27
      %p33 = scmp.eq.s32.totalorder %s14, 0
      %p34 = por %p32, %p33
      %p35 = scmp.ne.s32.totalorder %s24, %s27
      %p36 = scmp.eq.s32.totalorder %s19, 1
      %p37 = por %p35, %p36
      %p38 = scmp.ne.s32.totalorder %s27, %s28
      %p39 = scmp.eq.s32.totalorder %s19, 0
      %p40 = por %p38, %p39
      %p41 = scmp.ne.s32.totalorder %s27, %s28
      %p42 = scmp.eq.s32.totalorder %s20, 1
      %p43 = por %p41, %p42
      %p45 = scmp.ne.s32.totalorder %s28, %s44
      %p46 = scmp.eq.s32.totalorder %s20, 0
      %p47 = por %p45, %p46
      %s48 = ssub.s32 %s14, %s21
      %p49 = scmp.eq.s32.totalorder %s48, 0
      %s51 = sadd.s32 %s50, 1
      %s52 = scalar_select %p49, %s50, %s51
      %p55 = pneg %p49
      %p56 = scmp.eq.s32.totalorder %s14, 1
      %p57 = por %p55, %p56
      %p58 = scmp.ne.s32.totalorder %s50, %s53
      %p59 = scmp.eq.s32.totalorder %s14, 0
      %p60 = por %p58, %p59
      %p61 = scmp.ne.s32.totalorder %s50, %s53
      %p62 = scmp.eq.s32.totalorder %s19, 1
      %p63 = por %p61, %p62
      %p64 = scmp.ne.s32.totalorder %s53, %s54
      %p65 = scmp.eq.s32.totalorder %s19, 0
      %p66 = por %p64, %p65
      %p67 = scmp.ne.s32.totalorder %s53, %s54
      %p68 = scmp.eq.s32.totalorder %s20, 1
      %p69 = por %p67, %p68
      %p71 = scmp.ne.s32.totalorder %s54, %s70
      %p72 = scmp.eq.s32.totalorder %s20, 0
      %p73 = por %p71, %p72
      %s75 = sadd.s32 %s74, 1
      %p78 = scmp.eq.s32.totalorder %s14, 1
      %p79 = scmp.ne.s32.totalorder %s74, %s76
      %p80 = scmp.eq.s32.totalorder %s14, 0
      %p81 = por %p79, %p80
      %p82 = scmp.ne.s32.totalorder %s74, %s76
      %p83 = scmp.eq.s32.totalorder %s19, 1
      %p84 = por %p82, %p83
      %p85 = scmp.ne.s32.totalorder %s76, %s77
      %p86 = scmp.eq.s32.totalorder %s19, 0
      %p87 = por %p85, %p86
      %p88 = scmp.ne.s32.totalorder %s76, %s77
      %p89 = scmp.eq.s32.totalorder %s20, 1
      %p90 = por %p88, %p89
      %p92 = scmp.ne.s32.totalorder %s77, %s91
      %p93 = scmp.eq.s32.totalorder %s20, 0
      %p94 = por %p92, %p93
      %s95 = ssub.s32 %s14, %s21
      %p96 = scmp.eq.s32.totalorder %s95, 0
      %s98 = sadd.s32 %s97, 1
      %s99 = scalar_select %p96, %s97, %s98
      %p102 = pneg %p96
      %p103 = scmp.eq.s32.totalorder %s14, 1
      %p104 = por %p102, %p103
      %p105 = scmp.ne.s32.totalorder %s97, %s100
      %p106 = scmp.eq.s32.totalorder %s14, 0
      %p107 = por %p105, %p106
      %p108 = scmp.ne.s32.totalorder %s97, %s100
      %p109 = scmp.eq.s32.totalorder %s19, 1
      %p110 = por %p108, %p109
      %p111 = scmp.ne.s32.totalorder %s100, %s101
      %p112 = scmp.eq.s32.totalorder %s19, 0
      %p113 = por %p111, %p112
      %p114 = scmp.ne.s32.totalorder %s100, %s101
      %p115 = scmp.eq.s32.totalorder %s20, 1
      %p116 = por %p114, %p115
      %p118 = scmp.ne.s32.totalorder %s101, %s117
      %p119 = scmp.eq.s32.totalorder %s20, 0
      %p120 = por %p118, %p119
      %s121 = ssub.s32 %s14, %s21
      %p122 = scmp.eq.s32.totalorder %s121, 0
      %s124 = sadd.s32 %s123, 1
      %s125 = scalar_select %p122, %s123, %s124
      %p128 = pneg %p122
      %p129 = scmp.eq.s32.totalorder %s14, 1
      %p130 = por %p128, %p129
      %p131 = scmp.ne.s32.totalorder %s123, %s126
      %p132 = scmp.eq.s32.totalorder %s14, 0
      %p133 = por %p131, %p132
      %p134 = scmp.ne.s32.totalorder %s123, %s126
      %p135 = scmp.eq.s32.totalorder %s19, 1
      %p136 = por %p134, %p135
      %p137 = scmp.ne.s32.totalorder %s126, %s127
      %p138 = scmp.eq.s32.totalorder %s19, 0
      %p139 = por %p137, %p138
      %p140 = scmp.ne.s32.totalorder %s126, %s127
      %p141 = scmp.eq.s32.totalorder %s20, 1
      %p142 = por %p140, %p141
      %p144 = scmp.ne.s32.totalorder %s127, %s143
      %p145 = scmp.eq.s32.totalorder %s20, 0
      %p146 = por %p144, %p145
      %s147 = ssub.s32 %s14, %s21
      %p148 = scmp.eq.s32.totalorder %s147, 0
      %s150 = sadd.s32 %s149, 1
      %s151 = scalar_select %p148, %s149, %s150
      %p154 = pneg %p148
      %p155 = scmp.eq.s32.totalorder %s14, 1
      %p156 = por %p154, %p155
      %p157 = scmp.ne.s32.totalorder %s149, %s152
      %p158 = scmp.eq.s32.totalorder %s14, 0
      %p159 = por %p157, %p158
      %p160 = scmp.ne.s32.totalorder %s149, %s152
      %p161 = scmp.eq.s32.totalorder %s19, 1
      %p162 = por %p160, %p161
      %p163 = scmp.ne.s32.totalorder %s152, %s153
      %p164 = scmp.eq.s32.totalorder %s19, 0
      %p165 = por %p163, %p164
      %p166 = scmp.ne.s32.totalorder %s152, %s153
      %p167 = scmp.eq.s32.totalorder %s20, 1
      %p168 = por %p166, %p167
      %p170 = scmp.ne.s32.totalorder %s153, %s169
      %p171 = scmp.eq.s32.totalorder %s20, 0
      %p172 = por %p170, %p171
      %p173 = scmp.le.s32.totalorder 1, %s14
      %p174 = scmp.lt.s32.totalorder %s14, 3
      %p175 = pnand %p173, %p174
      %p176 = pneg %p175
      // Predicated region
      $region9: #{c1d_forward.1} parent=5 // pred_check
        _
      $region10: #{c1d_forward.1} parent=5 // pred_check_branch
        %178 = sbr.rel (%p175) target = $region12
      $region11: #{c1d_forward.1} parent=5 // pred_region
        %s179 = ssub.s32 %s14, 1
        // Predicated region
        $region13: #{c1d_forward.1} parent=11 // pred_check
          %p180 = pneg %p87
        $region14: #{c1d_forward.1} parent=11 // pred_check_branch
          %182 = sbr.rel (%p180) target = $region16
        $region15: #{c1d_forward.1} parent=11 // pred_region
          _
        $region16: #{c1d_forward.1} parent=11 // pred_fallthru
          _
      $region12: #{c1d_forward.1} parent=5 // pred_fallthru
        _
      %p183 = scmp.lt.s32.totalorder %s14, 2
      // Predicated region
      $region17: #{c1d_forward.1} parent=5 // pred_check
        %p184 = pneg %p183
      $region18: #{c1d_forward.1} parent=5 // pred_check_branch
        %186 = sbr.rel (%p184) target = $region20
      $region19: #{c1d_forward.1} parent=5 // pred_region
        // Predicated region
        $region21: #{c1d_forward.1} parent=19 // pred_check
          %p187 = pneg %p34
        $region22: #{c1d_forward.1} parent=19 // pred_check_branch
          %189 = sbr.rel (%p187) target = $region24
        $region23: #{c1d_forward.1} parent=19 // pred_region
          %s190 = sand.u32 %s24, 1
          %s191 = sand.u32 %s24, 1
          %s192 = smul.addr %s191, 8
          %s193 = scalar_lea.vmem [#allocation2], %s192
          %s194 = smul.addr %s14, 4
          %s195 = scalar_lea.vmem %s0, %s194
          // Predicated region
          $region25: #{c1d_forward.1} parent=23 // pred_check
            _
          $region26: #{c1d_forward.1} parent=23 // pred_check_branch
            %197 = sbr.rel (0) target = $region28
          $region27: #{c1d_forward.1} parent=23 // pred_region
            // Predicated region
            $region29: #{c1d_forward.1} parent=27 // pred_check
              _
            $region30: #{c1d_forward.1} parent=27 // pred_check_branch
              %199 = sbr.rel target = $region32
            $region31: #{c1d_forward.1} parent=27 // pred_region
              // Predicated region
              $region44: #{c1d_forward.1} parent=31 // pred_check
                _
              $region45: #{c1d_forward.1} parent=31 // pred_check_branch
                %216 = sbr.rel (0) target = $region47
              $region46: #{c1d_forward.1} parent=31 // pred_region
                loop: start=0, step=1, limit=1
                $region48: #{c1d_forward.1} parent=46 // loop_pre_header
                  _
                $region49: #{c1d_forward.1} parent=46 // loop_header
                  %s218 = sphi 0, %s222
                  %p219 = scmp.ge.s32.totalorder %s218, 1
                  %s223 = sphi %s195, %s195
                  %s224 = sphi %s193, %s193
                $region50: #{c1d_forward.1} parent=46 // loop_header_branch
                  %221 = sbr.rel (%p219) target = $region54
                $region51: #{c1d_forward.1} parent=46 // loop_body
                  _
                $region52: #{c1d_forward.1} parent=46 // loop_footer
                  %s222 = sadd.s32 1, %s218
                $region53: #{c1d_forward.1} parent=46 // loop_footer_branch
                  %217 = sbr.rel target = $region49
                $region54: #{c1d_forward.1} parent=46 // loop_exit
                  _
                loop: start=0, step=1, limit=1
                $region55: #{c1d_forward.1} parent=46 // loop_pre_header
                  _
                $region56: #{c1d_forward.1} parent=46 // loop_header
                  %s227 = sphi 0, %s231
                  %p228 = scmp.ge.s32.totalorder %s227, 1
                  %s232 = sphi %s195, %s195
                  %s233 = sphi %s193, %s193
                $region57: #{c1d_forward.1} parent=46 // loop_header_branch
                  %230 = sbr.rel (%p228) target = $region61
                $region58: #{c1d_forward.1} parent=46 // loop_body
                  %v234 = vld [vmem:[%s232] sm:$0xf]
                  %235 = vst [vmem:[%s233] sm:$0xf] %v234
                  %v236 = vld [vmem:[%s232 + $0x8] sm:$0xf]
                  %237 = vst [vmem:[%s233 + $0x4] sm:$0xf] %v236
                $region59: #{c1d_forward.1} parent=46 // loop_footer
                  %s231 = sadd.s32 1, %s227
                $region60: #{c1d_forward.1} parent=46 // loop_footer_branch
                  %226 = sbr.rel target = $region56
                $region61: #{c1d_forward.1} parent=46 // loop_exit
                  _
              $region47: #{c1d_forward.1} parent=31 // pred_fallthru
                _
            $region32: #{c1d_forward.1} parent=27 // pred_fallthru
              _
            // Predicated region
            $region33: #{c1d_forward.1} parent=27 // pred_check
              _
            $region34: #{c1d_forward.1} parent=27 // pred_check_branch
              %201 = sbr.rel (0) target = $region36
            $region35: #{c1d_forward.1} parent=27 // pred_region
              loop: start=0, step=1, limit=1
              $region37: #{c1d_forward.1} parent=35 // loop_pre_header
                _
              $region38: #{c1d_forward.1} parent=35 // loop_header
                %s204 = sphi 0, %s208
                %p205 = scmp.ge.s32.totalorder %s204, 1
                %s209 = sphi %s195, %s195
                %s210 = sphi %s193, %s193
              $region39: #{c1d_forward.1} parent=35 // loop_header_branch
                %207 = sbr.rel (%p205) target = $region43
              $region40: #{c1d_forward.1} parent=35 // loop_body
                %v211 = vld [vmem:[%s209] sm:$0xf]
                %212 = vst [vmem:[%s210] sm:$0xf] %v211
                %v213 = vld [vmem:[%s209 + $0x8] sm:$0xf]
                %214 = vst [vmem:[%s210 + $0x4] sm:$0xf] %v213
              $region41: #{c1d_forward.1} parent=35 // loop_footer
                %s208 = sadd.s32 1, %s204
              $region42: #{c1d_forward.1} parent=35 // loop_footer_branch
                %203 = sbr.rel target = $region38
              $region43: #{c1d_forward.1} parent=35 // loop_exit
                _
            $region36: #{c1d_forward.1} parent=27 // pred_fallthru
              _
          $region28: #{c1d_forward.1} parent=23 // pred_fallthru
            _
          %238 = vnop
        $region24: #{c1d_forward.1} parent=19 // pred_fallthru
          _
        // Predicated region
        $region62: #{c1d_forward.1} parent=19 // pred_check
          %p239 = pneg %p60
        $region63: #{c1d_forward.1} parent=19 // pred_check_branch
          %241 = sbr.rel (%p239) target = $region65
        $region64: #{c1d_forward.1} parent=19 // pred_region
          %s242 = sand.u32 %s50, 1
          %s243 = sand.u32 %s50, 1
          %s244 = smul.addr %s243, 2
          %s245 = scalar_lea.vmem [#allocation3], %s244
          %s246 = scalar_lea.vmem %s1, %s14
          // Predicated region
          $region66: #{c1d_forward.1} parent=64 // pred_check
            _
          $region67: #{c1d_forward.1} parent=64 // pred_check_branch
            %248 = sbr.rel (0) target = $region69
          $region68: #{c1d_forward.1} parent=64 // pred_region
            // Predicated region
            $region70: #{c1d_forward.1} parent=68 // pred_check
              _
            $region71: #{c1d_forward.1} parent=68 // pred_check_branch
              %250 = sbr.rel target = $region73
            $region72: #{c1d_forward.1} parent=68 // pred_region
              // Predicated region
              $region85: #{c1d_forward.1} parent=72 // pred_check
                _
              $region86: #{c1d_forward.1} parent=72 // pred_check_branch
                %267 = sbr.rel (0) target = $region88
              $region87: #{c1d_forward.1} parent=72 // pred_region
                loop: start=0, step=1, limit=1
                $region89: #{c1d_forward.1} parent=87 // loop_pre_header
                  _
                $region90: #{c1d_forward.1} parent=87 // loop_header
                  %s270 = sphi 0, %s274
                  %p271 = scmp.ge.s32.totalorder %s270, 1
                  %s275 = sphi %s246, %s246
                  %s276 = sphi %s245, %s245
                $region91: #{c1d_forward.1} parent=87 // loop_header_branch
                  %273 = sbr.rel (%p271) target = $region95
                $region92: #{c1d_forward.1} parent=87 // loop_body
                  %v277 = vld [vmem:[%s275] sm:$0x1]
                  %278 = vst [vmem:[%s276] sm:$0x1] %v277
                  %v279 = vld [vmem:[%s275 + $0x2] sm:$0x1]
                  %280 = vst [vmem:[%s276 + $0x1] sm:$0x1] %v279
                $region93: #{c1d_forward.1} parent=87 // loop_footer
                  %s274 = sadd.s32 1, %s270
                $region94: #{c1d_forward.1} parent=87 // loop_footer_branch
                  %269 = sbr.rel target = $region90
                $region95: #{c1d_forward.1} parent=87 // loop_exit
                  _
              $region88: #{c1d_forward.1} parent=72 // pred_fallthru
                _
            $region73: #{c1d_forward.1} parent=68 // pred_fallthru
              _
            // Predicated region
            $region74: #{c1d_forward.1} parent=68 // pred_check
              _
            $region75: #{c1d_forward.1} parent=68 // pred_check_branch
              %252 = sbr.rel (0) target = $region77
            $region76: #{c1d_forward.1} parent=68 // pred_region
              loop: start=0, step=1, limit=1
              $region78: #{c1d_forward.1} parent=76 // loop_pre_header
                _
              $region79: #{c1d_forward.1} parent=76 // loop_header
                %s255 = sphi 0, %s259
                %p256 = scmp.ge.s32.totalorder %s255, 1
                %s260 = sphi %s246, %s246
                %s261 = sphi %s245, %s245
              $region80: #{c1d_forward.1} parent=76 // loop_header_branch
                %258 = sbr.rel (%p256) target = $region84
              $region81: #{c1d_forward.1} parent=76 // loop_body
                %v262 = vld [vmem:[%s260] sm:$0x1]
                %263 = vst [vmem:[%s261] sm:$0x1] %v262
                %v264 = vld [vmem:[%s260 + $0x2] sm:$0x1]
                %265 = vst [vmem:[%s261 + $0x1] sm:$0x1] %v264
              $region82: #{c1d_forward.1} parent=76 // loop_footer
                %s259 = sadd.s32 1, %s255
              $region83: #{c1d_forward.1} parent=76 // loop_footer_branch
                %254 = sbr.rel target = $region79
              $region84: #{c1d_forward.1} parent=76 // loop_exit
                _
            $region77: #{c1d_forward.1} parent=68 // pred_fallthru
              _
          $region69: #{c1d_forward.1} parent=64 // pred_fallthru
            _
          %281 = vnop
        $region65: #{c1d_forward.1} parent=19 // pred_fallthru
          _
        // Predicated region
        $region96: #{c1d_forward.1} parent=19 // pred_check
          %p282 = pneg %p107
        $region97: #{c1d_forward.1} parent=19 // pred_check_branch
          %284 = sbr.rel (%p282) target = $region99
        $region98: #{c1d_forward.1} parent=19 // pred_region
          %p285 = scmp.lt.s32.totalorder %s14, 1
          %s286 = scalar_select %p285, %s14, 1
          %s287 = smul.addr %s286, 8
          %s288 = scalar_lea.vmem %s3, %s287
        $region99: #{c1d_forward.1} parent=19 // pred_fallthru
          _
        // Predicated region
        $region100: #{c1d_forward.1} parent=19 // pred_check
          %p289 = pneg %p133
        $region101: #{c1d_forward.1} parent=19 // pred_check_branch
          %291 = sbr.rel (%p289) target = $region103
        $region102: #{c1d_forward.1} parent=19 // pred_region
          %p292 = scmp.lt.s32.totalorder %s14, 1
          %s293 = scalar_select %p292, %s14, 1
          %s294 = smul.addr %s293, 8
          %s295 = scalar_lea.vmem %s4, %s294
        $region103: #{c1d_forward.1} parent=19 // pred_fallthru
          _
      $region20: #{c1d_forward.1} parent=5 // pred_fallthru
        _
      %p296 = scmp.le.s32.totalorder 1, %s14
      %p297 = scmp.lt.s32.totalorder %s14, 3
      %p298 = pnand %p296, %p297
      %p299 = pneg %p298
      // Predicated region
      $region104: #{c1d_forward.1} parent=5 // pred_check
        _
      $region105: #{c1d_forward.1} parent=5 // pred_check_branch
        %301 = sbr.rel (%p298) target = $region107
      $region106: #{c1d_forward.1} parent=5 // pred_region
        %s302 = ssub.s32 %s14, 1
        %s303 = sand.u32 %s27, 1
        %s304 = sand.u32 %s27, 1
        %s305 = smul.addr %s304, 8
        %s306 = scalar_lea.vmem [#allocation2], %s305
        // Predicated region
        $region108: #{c1d_forward.1} parent=106 // pred_check
          %p307 = pneg %p40
        $region109: #{c1d_forward.1} parent=106 // pred_check_branch
          %309 = sbr.rel (%p307) target = $region111
        $region110: #{c1d_forward.1} parent=106 // pred_region
          _
        $region111: #{c1d_forward.1} parent=106 // pred_fallthru
          _
        %s310 = sand.u32 %s53, 1
        %s311 = sand.u32 %s53, 1
        %s312 = smul.addr %s311, 2
        %s313 = scalar_lea.vmem [#allocation3], %s312
        // Predicated region
        $region112: #{c1d_forward.1} parent=106 // pred_check
          %p314 = pneg %p66
        $region113: #{c1d_forward.1} parent=106 // pred_check_branch
          %316 = sbr.rel (%p314) target = $region115
        $region114: #{c1d_forward.1} parent=106 // pred_region
          _
        $region115: #{c1d_forward.1} parent=106 // pred_fallthru
          _
        %s317 = sand.u32 %s27, 1
        %s318 = sand.u32 %s27, 1
        %s319 = smul.addr %s318, 8
        %s320 = scalar_lea.vmem [#allocation2], %s319
        %p321 = pneg %p40
        %p322 = pneg %p37
        %s323 = sand.u32 %s53, 1
        %s324 = sand.u32 %s53, 1
        %s325 = smul.addr %s324, 2
        %s326 = scalar_lea.vmem [#allocation3], %s325
        %p327 = pneg %p66
        %p328 = pneg %p63
        %p329 = pneg %p87
        %p330 = pneg %p84
        %p331 = scmp.lt.s32.totalorder %s19, 1
        %s332 = scalar_select %p331, %s19, 1
        %s333 = smul.addr %s332, 8
        %s334 = scalar_lea.vmem %s3, %s333
        %p335 = pneg %p113
        %p336 = pneg %p110
        %p337 = scmp.lt.s32.totalorder %s19, 1
        %s338 = scalar_select %p337, %s19, 1
        %s339 = smul.addr %s338, 8
        %s340 = scalar_lea.vmem %s4, %s339
        %p341 = pneg %p139
        %p342 = pneg %p136
        %p343 = pneg %p165
        %p344 = pneg %p162
        %s345 = sand.u32 %s152, 1
        %s346 = scalar_lea.sflag [#allocation5], %s345
        %s347 = sand.u32 %s152, 1
        %s348 = smul.addr %s347, 16
        %s349 = scalar_lea.vmem [#allocation4], %s348
        %p350 = scmp.lt.s32.totalorder %s19, 1
        %s351 = scalar_select %p350, %s19, 1
        %s352 = smul.addr %s351, 8
        %s353 = scalar_lea.vmem %s3, %s352
        %p354 = scmp.lt.s32.totalorder %s19, 1
        %s355 = scalar_select %p354, %s19, 1
        %s356 = smul.addr %s355, 8
        %s357 = scalar_lea.vmem %s4, %s356
        %v359 = vld [vmem:[%s306] sm:$0xf]
        %v360 = vld [vmem:[%s306 + $0x4] sm:$0xf]
        %v361 = vld [vmem:[%s313] sm:$0x1]
        %v362 = vld [vmem:[%s313 + $0x1] sm:$0x1]
        %v366 = vunpack.c.l.s4 1966171168
        %v367 = vunpack.c.0.s8 %v366
        %v368 = vlaneseq
        %v369 = vshrl.u32 %v368, 7
        %v370 = vsub.s32 %v367, %v369
        %v371 = vrot.slane %v361, %v370
        %v373 = vunpack.c.l.s4 1966171168
        %v374 = vunpack.c.0.s8 %v373
        %v375 = vlaneseq
        %v376 = vshrl.u32 %v375, 7
        %v377 = vsub.s32 %v374, %v376
        %v378 = vrot.slane %v371, %v377
        %v379 = vcombine.low %v378, %v378
        %v381 = vunpack.c.l.s4 1966171168
        %v382 = vunpack.c.0.s8 %v381
        %v383 = vlaneseq
        %v384 = vshrl.u32 %v383, 7
        %v385 = vsub.s32 %v382, %v384
        %v386 = vrot.slane %v362, %v385
        %v388 = vunpack.c.l.s4 1966171168
        %v389 = vunpack.c.0.s8 %v388
        %v390 = vlaneseq
        %v391 = vshrl.u32 %v390, 7
        %v392 = vsub.s32 %v389, %v391
        %v393 = vrot.slane %v386, %v392
        %v394 = vcombine.low %v393, %v393
        %vm395 = vcmask 1043456
        %v398 = vsel %vm395, %v359, %v379
        %v401 = vsel %vm395, %v360, %v394
        %v402 = vshrl.u32 %v398, 16
        %v404 = vshll.u32 %v398, 16
        %v406 = vrot.slane %v404, 1
        %v407 = vor.u32 %v402, %v406
        %v408 = vshrl.u32 %v401, 16
        %v410 = vshll.u32 %v401, 16
        %v412 = vrot.slane %v410, 1
        %v413 = vor.u32 %v408, %v412
        %414 = vrot.lane.b32.xlu0 %v407, 8
        %v415 = vpop.permute.xlu0 %414
        %416 = vrot.lane.b32.xlu0 %v413, 8
        %v417 = vpop.permute.xlu0 %416
        %v420 = vrot.slane %v398, 1
        %v421 = vrot.slane %v401, 1
        %422 = vrot.lane.b32.xlu0 %v420, 16
        %v423 = vpop.permute.xlu0 %422
        %424 = vrot.lane.b32.xlu0 %v421, 16
        %v425 = vpop.permute.xlu0 %424
        %vm426 = vcmask 64512
        %v428 = vsel %vm426, %v398, %v415
        %v430 = vsel %vm426, %v401, %v417
        %vm431 = vcmask 130048
        %v433 = vsel %vm431, %v428, %v423
        %v435 = vsel %vm431, %v430, %v425
        %v436 = vld [vmem:[%s2] sm:$0xf]
        %v437 = vld [vmem:[%s2 + $0x4] sm:$0xf]
        %v438 = vld [vmem:[%s2 + $0x8] sm:$0xf]
        %v441 = vunpack.c.l.b16 %v433
        %v442 = vunpack.c.l.b16 %v435
        %v443 = vpack.c.b16 %v442, %v441
        %v447 = vunpack.c.l.b16 %v436
        %v448 = vunpack.c.l.b16 %v437
        %v449 = vunpack.c.l.b16 %v438
        %v450 = vpack.c.b16 %v448, %v447
        %v451 = vpack.c.b16 %v449, %v449
        %vm453 = vcmask 195584
        %v455 = vsel %vm453, %v443, 0
        %v458 = vsel %vm395, %v451, 0
        %460 = vmatprep.subr.bf16.mxu0 0
        %461 = vmatpush1.bf16.msra.mxu0 %v450
        %462 = vmatprep.subr.bf16.mxu0 0
        %463 = vmatpush1.bf16.msra.mxu0 %v458
        %464 = vmatprep.subr.bf16.mxu0 0
        %465 = vmatpush1.bf16.msra.mxu0 0
        %466 = vmatprep.subr.bf16.mxu0 0
        %467 = vmatpush1.bf16.msra.mxu0 0
        %468 = vmatprep.subr.bf16.mxu0 0
        %469 = vmatpush1.bf16.msra.mxu0 0
        %470 = vmatprep.subr.bf16.mxu0 0
        %471 = vmatpush1.bf16.msra.mxu0 0
        %472 = vmatprep.subr.bf16.mxu0 0
        %473 = vmatpush1.bf16.msra.mxu0 0
        %474 = vmatprep.subr.bf16.mxu0 0
        %475 = vmatpush1.bf16.msra.mxu0 0
        %476 = vmatprep.subr.bf16.mxu0 0
        %477 = vmatpush1.bf16.msra.mxu0 0
        %478 = vmatprep.subr.bf16.mxu0 0
        %479 = vmatpush1.bf16.msra.mxu0 0
        %480 = vmatprep.subr.bf16.mxu0 0
        %481 = vmatpush1.bf16.msra.mxu0 0
        %482 = vmatprep.subr.bf16.mxu0 0
        %483 = vmatpush1.bf16.msra.mxu0 0
        %484 = vmatprep.subr.bf16.mxu0 0
        %485 = vmatpush1.bf16.msra.mxu0 0
        %486 = vmatprep.subr.bf16.mxu0 0
        %487 = vmatpush1.bf16.msra.mxu0 0
        %488 = vmatprep.subr.bf16.mxu0 0
        %489 = vmatpush1.bf16.msra.mxu0 0
        %490 = vmatprep.subr.bf16.mxu0 0
        %491 = vmatpush1.bf16.msra.mxu0 0
        %492 = vmatprep.mubr.bf16.mxu0 0
        %493 = vmatmul.mubr.bf16.gmra.mrb[0].mxu0 %v455
        %v494 = vpop.f32.mrb[0].mxu0
        %v495 = vadd.f32 0.0, %v494
        %v496 = vpop.f32.mrb[0].mxu0
        %v497 = vpop.f32.mrb[0].mxu0
        %v498 = vadd.f32 0.0, %v497
        %v499 = vpop.f32.mrb[0].mxu0
        %500 = vdwg.mxu0
        %v501 = vsel %vm431, %v495, 0.0
        %v502 = vsel %vm431, %v498, 0.0
        %v503 = vadd.f32 %v501, %v502
        %504 = vadd.xlane.f32.xlu0 %v503
        %v505 = vpop.xlane.xlu0 %504
        %v506 = vmul.f32 %v505, 0.03125
        %v507 = vmul.f32 %v495, %v495
        %v508 = vmul.f32 %v498, %v498
        %v509 = vsel %vm431, %v507, 0.0
        %v510 = vsel %vm431, %v508, 0.0
        %v511 = vadd.f32 %v509, %v510
        %512 = vadd.xlane.f32.xlu0 %v511
        %v513 = vpop.xlane.xlu0 %512
        %v514 = vmul.f32 %v513, 0.03125
        %v515 = vmul.f32 %v506, %v506
        %v516 = vsub.f32 %v514, %v515
        %v517 = vmax.f32 %v516, 0.0
        %v518 = vld [vmem:[%s353] sm:$0xff]
        %v519 = vadd.f32 %v517, 1e-05
        %v520 = vrsqrt.pop %v519
        %v521 = vmul.f32 %v518, %v520
        %v522 = vld [vmem:[%s357] sm:$0xff]
        %v523 = vmul.f32 %v506, %v521
        %v524 = vsub.f32 %v522, %v523
        %526 = vset.pattern.permute.xlu0 0
        %527 = vperm.xlu0 %526, %v521
        %v528 = vpop.permute.xlu0 %527
        %v530 = vmul.f32 %v495, %v528
        %v531 = vmul.f32 %v498, %v528
        %533 = vset.pattern.permute.xlu0 0
        %534 = vperm.xlu0 %533, %v524
        %v535 = vpop.permute.xlu0 %534
        %v537 = vadd.f32 %v530, %v535
        %v538 = vadd.f32 %v531, %v535
        %v539 = vmul.f32 %v537, 0.2
        %v540 = vmul.f32 %v538, 0.2
        %v541 = vmax.f32 %v537, %v539
        %v542 = vmax.f32 %v538, %v540
        %543 = vst.msk [vmem:[%s349] sm:$0xff] %vm431, %v541
        %544 = vst.msk [vmem:[%s349 + $0x8] sm:$0xff] %vm431, %v542
        %s545 = sand.u32 %s152, 1
        %s546 = scalar_lea.sflag [#allocation5], %s545
        %s547 = sand.u32 %s152, 1
        %s548 = smul.addr %s547, 16
        %s549 = scalar_lea.vmem [#allocation4], %s548
        // Predicated region
        $region116: #{c1d_forward.1} parent=106 // pred_check
          %p550 = pneg %p162
        $region117: #{c1d_forward.1} parent=106 // pred_check_branch
          %552 = sbr.rel (%p550) target = $region119
        $region118: #{c1d_forward.1} parent=106 // pred_region
          %s554 = ssub.s32 256, 256
          %555 = vsyncadd %s546, %s554
          %s556 = smul.addr %s19, 128
          %s557 = scalar_lea.hbm %s5, %s556
          %s558 = sshll.u32 %s549, 4
          %s559 = int_to_ptr.vmem [resolvable:$true] %s558
          %564 = dma.vmem_to_hbm [thread:$0]  %s559, 256, %s557, %s546, 128, 256, 8
        $region119: #{c1d_forward.1} parent=106 // pred_fallthru
          _
      $region107: #{c1d_forward.1} parent=5 // pred_fallthru
        _
      %p565 = scmp.le.s32.totalorder 2, %s14
      // Predicated region
      $region120: #{c1d_forward.1} parent=5 // pred_check
        %p566 = pneg %p565
      $region121: #{c1d_forward.1} parent=5 // pred_check_branch
        %568 = sbr.rel (%p566) target = $region123
      $region122: #{c1d_forward.1} parent=5 // pred_region
        %s569 = ssub.s32 %s14, 2
        // Predicated region
        $region124: #{c1d_forward.1} parent=122 // pred_check
          %p570 = pneg %p168
        $region125: #{c1d_forward.1} parent=122 // pred_check_branch
          %572 = sbr.rel (%p570) target = $region127
        $region126: #{c1d_forward.1} parent=122 // pred_region
          %s573 = sand.u32 %s153, 1
          %s574 = scalar_lea.sflag [#allocation5], %s573
          %s575 = sand.u32 %s153, 1
          %s576 = smul.addr %s575, 16
          %s577 = scalar_lea.vmem [#allocation4], %s576
          %578 = dma.done %s574, 256
        $region127: #{c1d_forward.1} parent=122 // pred_fallthru
          _
      $region123: #{c1d_forward.1} parent=5 // pred_fallthru
        _
    $region6: #{c1d_forward.1} parent=1 // loop_footer
      %s18 = sadd.s32 1, %s14
    $region7: #{c1d_forward.1} parent=1 // loop_footer_branch
      %13 = sbr.rel target = $region3
    $region8: #{c1d_forward.1} parent=1 // loop_exit
      _
    %579 = vsyncpa [#allocation5], 1
    %s580 = scalar_lea.sflag [#allocation5], 1
    %581 = vsyncpa %s580, 1

</llo_original>
